<compile_context>
chip_gen: v7x
topology: tpu7x:2x2x1
jax: 0.10.0
libtpu: 0.0.40
codegen_flags: <defaults>
</compile_context>

<pallas_src>
import functools

import jax
import jax.numpy as jnp
from jax import lax
from jax.experimental import pallas as pl
from jax.experimental.pallas import tpu as pltpu


def _cdiv(a: int, b: int) -> int:
    return -(-a // b)


def _round_up(a: int, b: int) -> int:
    return ((a + b - 1) // b) * b


def _tpu_memory_params():
    """Generation-aware (target_block_bytes, vmem_limit_bytes)."""
    block_bytes = 4 * 1024 * 1024          # safe default
    vmem_limit = 48 * 1024 * 1024          # safe everywhere (< 64 MiB physical on v7x)
    try:
        info = pltpu.get_tpu_info()
        vmem_cap = int(getattr(info, "vmem_capacity_bytes", 0) or 0)
        if vmem_cap and vmem_cap <= 64 * 1024 * 1024:
            # v7x-class: 64 MiB VMEM/TC, ~3.2 TB/s HBM -> bigger blocks so the
            # ~0.35 us/step pipeline overhead stays <10% of step time.
            # 2 in + 2 out double-buffered 8 MiB blocks = 32 MiB < 48 MiB limit.
            block_bytes, vmem_limit = 8 * 1024 * 1024, 48 * 1024 * 1024
        elif vmem_cap:
            # v5e/v6e-class: 128 MiB VMEM, 0.8-1.4 TB/s HBM -> 4 MiB blocks and a
            # generous (but well under physical) scoped-VMEM limit.
            block_bytes, vmem_limit = 4 * 1024 * 1024, 64 * 1024 * 1024
    except Exception:
        pass
    return block_bytes, vmem_limit


def _sublane(itemsize: int) -> int:
    # Native sublane tile: 8 for 4-byte, 16 for 2-byte, 32 for 1-byte dtypes.
    return max(8, 32 // max(1, itemsize))


def _pick_row_tile(num_rows: int, row_width: int, itemsize: int, block_bytes: int) -> int:
    """Row tile: multiple of the dtype's sublane tile, ~block_bytes per input block,
    capped so the grid keeps >=8 steps (>=4 per TensorCore on dual-core parts)."""
    sub = _sublane(itemsize)
    if num_rows <= sub:
        return num_rows                     # single full-array block
    tr = max(sub, (block_bytes // (row_width * itemsize)) // sub * sub)
    tr = min(tr, max(sub, _round_up(_cdiv(num_rows, 8), sub)))
    return tr


def _layernorm_rows_kernel(x_ref, gamma_ref, beta_ref, o_ref, *, eps):
    # x_ref: (tr, hidden); gamma_ref / beta_ref: (1, hidden). Rows are independent,
    # so garbage rows in a ragged last block cannot affect valid rows.
    x = x_ref[...].astype(jnp.float32)
    mean = jnp.mean(x, axis=-1, keepdims=True)
    centered = x - mean
    var = jnp.mean(centered * centered, axis=-1, keepdims=True)
    y = centered * lax.rsqrt(var + eps)
    y = y * gamma_ref[...].astype(jnp.float32) + beta_ref[...].astype(jnp.float32)
    o_ref[...] = y.astype(o_ref.dtype)


def _group_mean(v, p_bf16):
    # Per-group averaging on the MXU with near-f32 accuracy at low cost:
    # split the f32 operand into bf16 hi + lo halves.  P's entries (0 or
    # 1/hidden, hidden a power of two) are exact in bf16, so two native bf16
    # passes reproduce the f32 result to ~2^-18 relative error -- 1/3 of the
    # MXU work of a Precision.HIGHEST f32 matmul (keeps v5e HBM-bound).
    hi = v.astype(jnp.bfloat16)
    lo = (v - hi.astype(jnp.float32)).astype(jnp.bfloat16)
    return (jnp.dot(hi, p_bf16, preferred_element_type=jnp.float32)
            + jnp.dot(lo, p_bf16, preferred_element_type=jnp.float32))


def _layernorm_packed_kernel(x_ref, p_ref, gamma_ref, beta_ref, o_ref, *, eps):
    # x_ref: (tr, 128) with k = 128 // hidden independent LayerNorm groups per
    # packed row.  p_ref: (128, 128) bf16 block-diagonal averaging matrix,
    # hoisted out of the kernel and resident in VMEM (constant block index).
    x = x_ref[...].astype(jnp.float32)
    p = p_ref[...]
    mean = _group_mean(x, p)
    centered = x - mean
    var = _group_mean(centered * centered, p)
    y = centered * lax.rsqrt(var + eps)
    y = y * gamma_ref[...].astype(jnp.float32) + beta_ref[...].astype(jnp.float32)
    o_ref[...] = y.astype(o_ref.dtype)


def _call(kernel, x2, consts, tr, vmem_limit):
    rows, width = x2.shape
    grid = (pl.cdiv(rows, tr),)     # ragged last block handled by Pallas (no pad/slice)
    const_specs = [pl.BlockSpec(tuple(c.shape), lambda i: (0, 0)) for c in consts]
    return pl.pallas_call(
        kernel,
        out_shape=jax.ShapeDtypeStruct((rows, width), x2.dtype),
        grid_spec=pltpu.PrefetchScalarGridSpec(
            num_scalar_prefetch=0,
            grid=grid,
            in_specs=[pl.BlockSpec((tr, width), lambda i: (i, 0))] + const_specs,
            out_specs=pl.BlockSpec((tr, width), lambda i: (i, 0)),
        ),
        compiler_params=pltpu.CompilerParams(
            dimension_semantics=("parallel",),
            vmem_limit_bytes=vmem_limit,
        ),
    )(x2, *consts)


def layer_norm(x: jax.Array, gamma: jax.Array, beta: jax.Array,
               eps: float = 1e-5) -> jax.Array:
    """LayerNorm over the last axis of `x` (any leading shape); same math as nn.LayerNorm."""
    orig_shape = x.shape
    hidden = int(orig_shape[-1])
    rows = 1
    for d in orig_shape[:-1]:
        rows *= int(d)
    x2 = x.reshape(rows, hidden)
    itemsize = jnp.dtype(x.dtype).itemsize
    block_bytes, vmem_limit = _tpu_memory_params()

    k = (128 // hidden) if (hidden < 128 and 128 % hidden == 0) else 0
    if k and rows % k == 0:
        # Lane-dense repack: k rows (= k LayerNorm groups) share one 128-lane
        # vreg row.  The reshape is contiguity-preserving (rows % k == 0), so it
        # is a free bitcast -- no HBM copy.
        packed_rows = rows // k
        xp = x2.reshape(packed_rows, 128)
        lane = jnp.arange(128, dtype=jnp.int32)
        p = jnp.where((lane[:, None] // hidden) == (lane[None, :] // hidden),
                      jnp.float32(1.0 / hidden), jnp.float32(0.0)).astype(jnp.bfloat16)
        gamma2 = jnp.tile(gamma.reshape(1, hidden), (1, k))
        beta2 = jnp.tile(beta.reshape(1, hidden), (1, k))
        tr = _pick_row_tile(packed_rows, 128, itemsize, block_bytes)
        kernel = functools.partial(_layernorm_packed_kernel, eps=eps)
        out = _call(kernel, xp, (p, gamma2, beta2), tr, vmem_limit)
        out = out.reshape(rows, hidden)          # free bitcast reshape back
    else:
        # General row-tiled path (hidden kept whole per block; lane-dense when
        # hidden is a multiple of 128).  Also the fallback when rows % k != 0,
        # which avoids any padding copy.
        tr = _pick_row_tile(rows, hidden, itemsize, block_bytes)
        kernel = functools.partial(_layernorm_rows_kernel, eps=eps)
        out = _call(kernel, x2,
                    (gamma.reshape(1, hidden), beta.reshape(1, hidden)),
                    tr, vmem_limit)

    return out.reshape(orig_shape)


def _reference_layer_norm(x, gamma, beta, eps=1e-5):
    xf = x.astype(jnp.float32)
    mean = jnp.mean(xf, axis=-1, keepdims=True)
    var = jnp.mean((xf - mean) ** 2, axis=-1, keepdims=True)
    y = (xf - mean) * lax.rsqrt(var + eps) * gamma + beta
    return y.astype(x.dtype)


if __name__ == "__main__":
    key = jax.random.PRNGKey(0)
    k_x, k_x2, k_g2, k_b2, k_x3 = jax.random.split(key, 5)

    # Shape implied by the NER module: (batch, seq, hidden), hidden < 128
    # -> exercises the lane-dense packed path (zero-copy reshape, grid=1 block).
    batch, seq, hidden = 2, 8, 32
    x = jax.random.normal(k_x, (batch, seq, hidden), dtype=jnp.float32)
    gamma = jnp.ones((hidden,), dtype=jnp.float32)   # nn.LayerNorm default init
    beta = jnp.zeros((hidden,), dtype=jnp.float32)

    y = layer_norm(x, gamma, beta)
    jax.block_until_ready(y)
    ref = _reference_layer_norm(x, gamma, beta)
    assert y.shape == x.shape
    assert jnp.allclose(y, ref, atol=1e-4, rtol=1e-4), "packed path mismatch vs reference"

    # hidden >= 128 with a row count that does NOT divide the tile
    # -> exercises the general path with a ragged last block (no pad, no slice).
    b2, s2, h2 = 3, 5, 256
    x_b = jax.random.normal(k_x2, (b2, s2, h2), dtype=jnp.float32)
    g_b = jax.random.normal(k_g2, (h2,), dtype=jnp.float32)
    be_b = jax.random.normal(k_b2, (h2,), dtype=jnp.float32)

    y_b = layer_norm(x_b, g_b, be_b)
    jax.block_until_ready(y_b)
    ref_b = _reference_layer_norm(x_b, g_b, be_b)
    assert jnp.allclose(y_b, ref_b, atol=1e-4, rtol=1e-4), "row path mismatch vs reference"

    # hidden < 128 but rows % k != 0 -> exercises the no-pad fallback path.
    x_c = jax.random.normal(k_x3, (1, 3, hidden), dtype=jnp.float32)
    y_c = layer_norm(x_c, gamma, beta)
    jax.block_until_ready(y_c)
    ref_c = _reference_layer_norm(x_c, gamma, beta)
    assert jnp.allclose(y_c, ref_c, atol=1e-4, rtol=1e-4), "fallback path mismatch vs reference"

    print("KERNEL_OK")
</pallas_src>

<mosaic_0001>
module attributes {stable_mosaic.version = 11 : i64} {
  func.func @_layernorm_packed_kernel(%arg0: i32, %arg1: memref<4x128xf32, #tpu.memory_space<vmem>>, %arg2: memref<128x128xbf16, #tpu.memory_space<vmem>>, %arg3: memref<1x128xf32, #tpu.memory_space<vmem>>, %arg4: memref<1x128xf32, #tpu.memory_space<vmem>>, %arg5: memref<4x128xf32, #tpu.memory_space<vmem>>) attributes {dimension_semantics = [#tpu.dimension_semantics<parallel>], iteration_bounds = array<i64: 1>, scalar_prefetch = 0 : i64, scratch_operands = 0 : i64, tpu.core_type = #tpu.core_type<tc>, window_params = [{transform_indices = @transform_0, window_bounds = array<i64: 4, 128>}, {pipeline_mode = #tpu.pipeline_mode<synchronous>, transform_indices = @transform_1, window_bounds = array<i64: 128, 128>}, {pipeline_mode = #tpu.pipeline_mode<synchronous>, transform_indices = @transform_2, window_bounds = array<i64: 1, 128>}, {pipeline_mode = #tpu.pipeline_mode<synchronous>, transform_indices = @transform_3, window_bounds = array<i64: 1, 128>}, {transform_indices = @transform_4, window_bounds = array<i64: 4, 128>}]} {
    %c0 = arith.constant 0 : index
    %c0_0 = arith.constant 0 : index
    %0 = vector.load %arg1[%c0, %c0_0] : memref<4x128xf32, #tpu.memory_space<vmem>>, vector<4x128xf32>
    %c0_1 = arith.constant 0 : index
    %c0_2 = arith.constant 0 : index
    %1 = vector.load %arg2[%c0_1, %c0_2] : memref<128x128xbf16, #tpu.memory_space<vmem>>, vector<128x128xbf16>
    %2 = arith.truncf %0 : vector<4x128xf32> to vector<4x128xbf16>
    %3 = arith.extf %2 : vector<4x128xbf16> to vector<4x128xf32>
    %4 = arith.subf %0, %3 : vector<4x128xf32>
    %5 = arith.truncf %4 : vector<4x128xf32> to vector<4x128xbf16>
    %cst = arith.constant dense<0.000000e+00> : vector<4x128xf32>
    %6 = tpu.matmul %2, %1, %cst {dimension_numbers = #tpu.dot_dimension_numbers<[1], [0], [0], [1], [0, 0, 1, 1], [], []>} : vector<4x128xbf16>, vector<128x128xbf16>, vector<4x128xf32> -> vector<4x128xf32>
    %cst_3 = arith.constant dense<0.000000e+00> : vector<4x128xf32>
    %7 = tpu.matmul %5, %1, %cst_3 {dimension_numbers = #tpu.dot_dimension_numbers<[1], [0], [0], [1], [0, 0, 1, 1], [], []>} : vector<4x128xbf16>, vector<128x128xbf16>, vector<4x128xf32> -> vector<4x128xf32>
    %8 = arith.addf %6, %7 : vector<4x128xf32>
    %9 = arith.subf %0, %8 : vector<4x128xf32>
    %10 = arith.mulf %9, %9 : vector<4x128xf32>
    %11 = arith.truncf %10 : vector<4x128xf32> to vector<4x128xbf16>
    %12 = arith.extf %11 : vector<4x128xbf16> to vector<4x128xf32>
    %13 = arith.subf %10, %12 : vector<4x128xf32>
    %14 = arith.truncf %13 : vector<4x128xf32> to vector<4x128xbf16>
    %cst_4 = arith.constant dense<0.000000e+00> : vector<4x128xf32>
    %15 = tpu.matmul %11, %1, %cst_4 {dimension_numbers = #tpu.dot_dimension_numbers<[1], [0], [0], [1], [0, 0, 1, 1], [], []>} : vector<4x128xbf16>, vector<128x128xbf16>, vector<4x128xf32> -> vector<4x128xf32>
    %cst_5 = arith.constant dense<0.000000e+00> : vector<4x128xf32>
    %16 = tpu.matmul %14, %1, %cst_5 {dimension_numbers = #tpu.dot_dimension_numbers<[1], [0], [0], [1], [0, 0, 1, 1], [], []>} : vector<4x128xbf16>, vector<128x128xbf16>, vector<4x128xf32> -> vector<4x128xf32>
    %17 = arith.addf %15, %16 : vector<4x128xf32>
    %cst_6 = arith.constant 9.99999974E-6 : f32
    %18 = vector.broadcast %cst_6 : f32 to vector<4x128xf32>
    %19 = arith.addf %17, %18 : vector<4x128xf32>
    %20 = math.rsqrt %19 : vector<4x128xf32>
    %21 = arith.mulf %9, %20 : vector<4x128xf32>
    %c0_7 = arith.constant 0 : index
    %c0_8 = arith.constant 0 : index
    %22 = vector.load %arg3[%c0_7, %c0_8] : memref<1x128xf32, #tpu.memory_space<vmem>>, vector<1x128xf32>
    %23 = vector.broadcast %22 : vector<1x128xf32> to vector<4x128xf32>
    %24 = arith.mulf %21, %23 : vector<4x128xf32>
    %c0_9 = arith.constant 0 : index
    %c0_10 = arith.constant 0 : index
    %25 = vector.load %arg4[%c0_9, %c0_10] : memref<1x128xf32, #tpu.memory_space<vmem>>, vector<1x128xf32>
    %26 = vector.broadcast %25 : vector<1x128xf32> to vector<4x128xf32>
    %27 = arith.addf %24, %26 : vector<4x128xf32>
    %c0_11 = arith.constant 0 : index
    %c0_12 = arith.constant 0 : index
    %28 = vector.load %arg5[%c0_11, %c0_12] : memref<4x128xf32, #tpu.memory_space<vmem>>, vector<4x128xf32>
    tpu.vector_store %arg5[%c0_11, %c0_12], %27 {strides = array<i32>} : memref<4x128xf32, #tpu.memory_space<vmem>>, vector<4x128xf32>,
    return
  }
  func.func @transform_0(%arg0: i32) -> (i32, i32) {
    %c0_i32 = arith.constant 0 : i32
    %c0_i32_0 = arith.constant 0 : i32
    return %arg0, %c0_i32 : i32, i32
  }
  func.func @transform_1(%arg0: i32) -> (i32, i32) {
    %c0_i32 = arith.constant 0 : i32
    %c0_i32_0 = arith.constant 0 : i32
    %c0_i32_1 = arith.constant 0 : i32
    return %c0_i32, %c0_i32_0 : i32, i32
  }
  func.func @transform_2(%arg0: i32) -> (i32, i32) {
    %c0_i32 = arith.constant 0 : i32
    %c0_i32_0 = arith.constant 0 : i32
    %c0_i32_1 = arith.constant 0 : i32
    return %c0_i32, %c0_i32_0 : i32, i32
  }
  func.func @transform_3(%arg0: i32) -> (i32, i32) {
    %c0_i32 = arith.constant 0 : i32
    %c0_i32_0 = arith.constant 0 : i32
    %c0_i32_1 = arith.constant 0 : i32
    return %c0_i32, %c0_i32_0 : i32, i32
  }
  func.func @transform_4(%arg0: i32) -> (i32, i32) {
    %c0_i32 = arith.constant 0 : i32
    %c0_i32_0 = arith.constant 0 : i32
    return %arg0, %c0_i32 : i32, i32
  }
}

</mosaic_0001>

<llo_original>
// kernel: tpu_custom_call.1
$region0: #{tpu_custom_call.1}
  #allocation0 [shape = 'u32[]', space=smem, size = 0x4, offset = 0x4, fixed_abs, tag = 'smem constant byte address 0x4 - core index']
  #allocation1 [shape = 'u32[144,128]{1,0:T(1,128)}', space=vmem, size = 0x12000, scoped, tag = 'internal scratch']
  %s0 = inlined_call_operand.hbm [shape: f32[4,128], index: 0, kind: input, shape index: {}]
  %s1 = inlined_call_operand.hbm [shape: bf16[128,128], index: 1, kind: input, shape index: {}]
  %s2 = inlined_call_operand.vmem [shape: f32[1,128], index: 2, kind: input, shape index: {}]
  %s3 = inlined_call_operand.vmem [shape: f32[1,128], index: 3, kind: input, shape index: {}]
  %s4 = inlined_call_operand.hbm [shape: f32[4,128], index: 4, kind: output, shape index: {}]
  %s5 = sld [smem:[#allocation0]]
  $region34: #{tpu_custom_call.1} parent=0
    _
  %s7 = ssub.s32 1, %s5
  %s8 = scalar_select 0, %s7, %s5
  $region1: #{tpu_custom_call.1} parent=0
    #allocation2 [shape = 'u8[2048]{0}', space=vmem, size = 0x800, scoped, tag = 'input window, operand 0, single buffered']
    #allocation3 [shape = 's32[1]{0}', space=sflag, size = 0x4, scoped, tag = 'scoped memory for tpu_custom_call.1']
    #allocation4 [shape = 's32[1]{0}', space=sflag, size = 0x4, scoped, tag = 'scoped memory for tpu_custom_call.1']
    #allocation5 [shape = 'u8[32768]{0}', space=vmem, size = 0x8000, scoped, tag = 'input window, operand 1, single buffered']
    #allocation6 [shape = 's32[1]{0}', space=sflag, size = 0x4, scoped, tag = 'scoped memory for tpu_custom_call.1']
    #allocation7 [shape = 'u8[2048]{0}', space=vmem, size = 0x800, scoped, tag = 'output window, operand 0, single buffered']
    %9 = vsyncpa [#allocation3], 0
    %10 = vsyncpa [#allocation6], 0
    %11 = vsyncpa [#allocation4], 0
    // Predicated region
    $region2: #{tpu_custom_call.1} parent=1 // pred_check
      _
    $region3: #{tpu_custom_call.1} parent=1 // pred_check_branch
      %13 = sbr.rel (0) target = $region5
    $region4: #{tpu_custom_call.1} parent=1 // pred_region
      %s15 = ssub.s32 64, 64
      %16 = vsyncadd [#allocation3], %s15
      %s18 = sshll.u32 [#allocation2], 4
      %s19 = int_to_ptr.vmem [resolvable:$true] %s18
      %21 = dma.hbm_to_vmem [thread:$0]  %s0, 64, %s19, [#allocation3]
    $region5: #{tpu_custom_call.1} parent=1 // pred_fallthru
      _
    // Predicated region
    $region6: #{tpu_custom_call.1} parent=1 // pred_check
      _
    $region7: #{tpu_custom_call.1} parent=1 // pred_check_branch
      %23 = sbr.rel (0) target = $region9
    $region8: #{tpu_custom_call.1} parent=1 // pred_region
      %s25 = ssub.s32 1024, 1024
      %26 = vsyncadd [#allocation6], %s25
      %s27 = sshll.u32 [#allocation5], 4
      %s28 = int_to_ptr.vmem [resolvable:$true] %s27
      %33 = dma.hbm_to_vmem [thread:$0]  %s1, 1024, %s28, [#allocation6], 64, 64, 4
    $region9: #{tpu_custom_call.1} parent=1 // pred_fallthru
      _
    // Predicated region
    $region10: #{tpu_custom_call.1} parent=1 // pred_check
      _
    $region11: #{tpu_custom_call.1} parent=1 // pred_check_branch
      %35 = sbr.rel (0) target = $region13
    $region12: #{tpu_custom_call.1} parent=1 // pred_region
      _
    $region13: #{tpu_custom_call.1} parent=1 // pred_fallthru
      _
    // Predicated region
    $region14: #{tpu_custom_call.1} parent=1 // pred_check
      _
    $region15: #{tpu_custom_call.1} parent=1 // pred_check_branch
      %37 = sbr.rel (0) target = $region17
    $region16: #{tpu_custom_call.1} parent=1 // pred_region
      _
    $region17: #{tpu_custom_call.1} parent=1 // pred_fallthru
      _
    // Predicated region
    $region18: #{tpu_custom_call.1} parent=1 // pred_check
      _
    $region19: #{tpu_custom_call.1} parent=1 // pred_check_branch
      %39 = sbr.rel (0) target = $region21
    $region20: #{tpu_custom_call.1} parent=1 // pred_region
      %40 = dma.done [#allocation3], 64
    $region21: #{tpu_custom_call.1} parent=1 // pred_fallthru
      _
    // Predicated region
    $region22: #{tpu_custom_call.1} parent=1 // pred_check
      _
    $region23: #{tpu_custom_call.1} parent=1 // pred_check_branch
      %42 = sbr.rel (0) target = $region25
    $region24: #{tpu_custom_call.1} parent=1 // pred_region
      %43 = dma.done [#allocation6], 1024
    $region25: #{tpu_custom_call.1} parent=1 // pred_fallthru
      _
    %v45 = vld [vmem:[#allocation2] sm:$0xf]
    %v46 = vld [vmem:[#allocation5] sm:$0xf]
    %v47 = vld [vmem:[#allocation5 + $0x4] sm:$0xf]
    %v48 = vld [vmem:[#allocation5 + $0x8] sm:$0xf]
    %v49 = vld [vmem:[#allocation5 + $0xc] sm:$0xf]
    %v50 = vld [vmem:[#allocation5 + $0x10] sm:$0xf]
    %v51 = vld [vmem:[#allocation5 + $0x14] sm:$0xf]
    %v52 = vld [vmem:[#allocation5 + $0x18] sm:$0xf]
    %v53 = vld [vmem:[#allocation5 + $0x1c] sm:$0xf]
    %v54 = vld [vmem:[#allocation5 + $0x20] sm:$0xf]
    %v55 = vld [vmem:[#allocation5 + $0x24] sm:$0xf]
    %v56 = vld [vmem:[#allocation5 + $0x28] sm:$0xf]
    %v57 = vld [vmem:[#allocation5 + $0x2c] sm:$0xf]
    %v58 = vld [vmem:[#allocation5 + $0x30] sm:$0xf]
    %v59 = vld [vmem:[#allocation5 + $0x34] sm:$0xf]
    %v60 = vld [vmem:[#allocation5 + $0x38] sm:$0xf]
    %v61 = vld [vmem:[#allocation5 + $0x3c] sm:$0xf]
    %v62 = vpack.c.bf16 %v45, %v45
    %v63 = vunpack.c.l.bf16 %v62
    %v64 = vsub.f32 %v45, %v63
    %v65 = vpack.c.bf16 %v64, %v64
    %v82 = vunpack.c.l.b16 %v46
    %v83 = vunpack.c.l.b16 %v47
    %v84 = vunpack.c.l.b16 %v48
    %v85 = vunpack.c.l.b16 %v49
    %v86 = vunpack.c.l.b16 %v50
    %v87 = vunpack.c.l.b16 %v51
    %v88 = vunpack.c.l.b16 %v52
    %v89 = vunpack.c.l.b16 %v53
    %v90 = vunpack.c.l.b16 %v54
    %v91 = vunpack.c.l.b16 %v55
    %v92 = vunpack.c.l.b16 %v56
    %v93 = vunpack.c.l.b16 %v57
    %v94 = vunpack.c.l.b16 %v58
    %v95 = vunpack.c.l.b16 %v59
    %v96 = vunpack.c.l.b16 %v60
    %v97 = vunpack.c.l.b16 %v61
    %v98 = vpack.c.b16 %v83, %v82
    %v99 = vpack.c.b16 %v85, %v84
    %v100 = vpack.c.b16 %v87, %v86
    %v101 = vpack.c.b16 %v89, %v88
    %v102 = vpack.c.b16 %v91, %v90
    %v103 = vpack.c.b16 %v93, %v92
    %v104 = vpack.c.b16 %v95, %v94
    %v105 = vpack.c.b16 %v97, %v96
    %114 = vmatprep.subr.bf16.mxu0 0
    %115 = vmatpush1.bf16.msra.mxu0 %v98
    %116 = vmatprep.subr.bf16.mxu0 0
    %117 = vmatpush1.bf16.msra.mxu0 %v99
    %118 = vmatprep.subr.bf16.mxu0 0
    %119 = vmatpush1.bf16.msra.mxu0 %v100
    %120 = vmatprep.subr.bf16.mxu0 0
    %121 = vmatpush1.bf16.msra.mxu0 %v101
    %122 = vmatprep.subr.bf16.mxu0 0
    %123 = vmatpush1.bf16.msra.mxu0 %v102
    %124 = vmatprep.subr.bf16.mxu0 0
    %125 = vmatpush1.bf16.msra.mxu0 %v103
    %126 = vmatprep.subr.bf16.mxu0 0
    %127 = vmatpush1.bf16.msra.mxu0 %v104
    %128 = vmatprep.subr.bf16.mxu0 0
    %129 = vmatpush1.bf16.msra.mxu0 %v105
    %130 = vmatprep.subr.bf16.mxu0 0
    %131 = vmatpush1.bf16.msra.mxu0 0
    %132 = vmatprep.subr.bf16.mxu0 0
    %133 = vmatpush1.bf16.msra.mxu0 0
    %134 = vmatprep.subr.bf16.mxu0 0
    %135 = vmatpush1.bf16.msra.mxu0 0
    %136 = vmatprep.subr.bf16.mxu0 0
    %137 = vmatpush1.bf16.msra.mxu0 0
    %138 = vmatprep.subr.bf16.mxu0 0
    %139 = vmatpush1.bf16.msra.mxu0 0
    %140 = vmatprep.subr.bf16.mxu0 0
    %141 = vmatpush1.bf16.msra.mxu0 0
    %142 = vmatprep.subr.bf16.mxu0 0
    %143 = vmatpush1.bf16.msra.mxu0 0
    %144 = vmatprep.subr.bf16.mxu0 0
    %145 = vmatpush1.bf16.msra.mxu0 0
    %146 = vmatprep.mubr.bf16.mxu0 0
    %147 = vmatmul.mubr.bf16.gmra.mrb[0].mxu0 %v65
    %v148 = vpop.f32.mrb[0].mxu0
    %v149 = vadd.f32 0.0, %v148
    %v150 = vpop.f32.mrb[0].mxu0
    %v151 = vpop.f32.mrb[0].mxu0
    %v152 = vpop.f32.mrb[0].mxu0
    %153 = vdwg.mxu0
    %154 = vmatprep.subr.bf16.mxu0 0
    %155 = vmatpush1.bf16.msra.mxu0 %v98
    %156 = vmatprep.subr.bf16.mxu0 0
    %157 = vmatpush1.bf16.msra.mxu0 %v99
    %158 = vmatprep.subr.bf16.mxu0 0
    %159 = vmatpush1.bf16.msra.mxu0 %v100
    %160 = vmatprep.subr.bf16.mxu0 0
    %161 = vmatpush1.bf16.msra.mxu0 %v101
    %162 = vmatprep.subr.bf16.mxu0 0
    %163 = vmatpush1.bf16.msra.mxu0 %v102
    %164 = vmatprep.subr.bf16.mxu0 0
    %165 = vmatpush1.bf16.msra.mxu0 %v103
    %166 = vmatprep.subr.bf16.mxu0 0
    %167 = vmatpush1.bf16.msra.mxu0 %v104
    %168 = vmatprep.subr.bf16.mxu0 0
    %169 = vmatpush1.bf16.msra.mxu0 %v105
    %170 = vmatprep.subr.bf16.mxu0 0
    %171 = vmatpush1.bf16.msra.mxu0 0
    %172 = vmatprep.subr.bf16.mxu0 0
    %173 = vmatpush1.bf16.msra.mxu0 0
    %174 = vmatprep.subr.bf16.mxu0 0
    %175 = vmatpush1.bf16.msra.mxu0 0
    %176 = vmatprep.subr.bf16.mxu0 0
    %177 = vmatpush1.bf16.msra.mxu0 0
    %178 = vmatprep.subr.bf16.mxu0 0
    %179 = vmatpush1.bf16.msra.mxu0 0
    %180 = vmatprep.subr.bf16.mxu0 0
    %181 = vmatpush1.bf16.msra.mxu0 0
    %182 = vmatprep.subr.bf16.mxu0 0
    %183 = vmatpush1.bf16.msra.mxu0 0
    %184 = vmatprep.subr.bf16.mxu0 0
    %185 = vmatpush1.bf16.msra.mxu0 0
    %186 = vmatprep.mubr.bf16.mxu0 0
    %187 = vmatmul.mubr.bf16.gmra.mrb[0].mxu0 %v62
    %v188 = vpop.f32.mrb[0].mxu0
    %v189 = vadd.f32 %v149, %v188
    %v190 = vpop.f32.mrb[0].mxu0
    %v191 = vpop.f32.mrb[0].mxu0
    %v192 = vpop.f32.mrb[0].mxu0
    %193 = vdwg.mxu0
    %v194 = vsub.f32 %v45, %v189
    %v195 = vmul.f32 %v194, %v194
    %v196 = vpack.c.bf16 %v195, %v195
    %v197 = vunpack.c.l.bf16 %v196
    %v198 = vsub.f32 %v195, %v197
    %v199 = vpack.c.bf16 %v198, %v198
    %200 = vmatprep.subr.bf16.mxu0 0
    %201 = vmatpush1.bf16.msra.mxu0 %v98
    %202 = vmatprep.subr.bf16.mxu0 0
    %203 = vmatpush1.bf16.msra.mxu0 %v99
    %204 = vmatprep.subr.bf16.mxu0 0
    %205 = vmatpush1.bf16.msra.mxu0 %v100
    %206 = vmatprep.subr.bf16.mxu0 0
    %207 = vmatpush1.bf16.msra.mxu0 %v101
    %208 = vmatprep.subr.bf16.mxu0 0
    %209 = vmatpush1.bf16.msra.mxu0 %v102
    %210 = vmatprep.subr.bf16.mxu0 0
    %211 = vmatpush1.bf16.msra.mxu0 %v103
    %212 = vmatprep.subr.bf16.mxu0 0
    %213 = vmatpush1.bf16.msra.mxu0 %v104
    %214 = vmatprep.subr.bf16.mxu0 0
    %215 = vmatpush1.bf16.msra.mxu0 %v105
    %216 = vmatprep.subr.bf16.mxu0 0
    %217 = vmatpush1.bf16.msra.mxu0 0
    %218 = vmatprep.subr.bf16.mxu0 0
    %219 = vmatpush1.bf16.msra.mxu0 0
    %220 = vmatprep.subr.bf16.mxu0 0
    %221 = vmatpush1.bf16.msra.mxu0 0
    %222 = vmatprep.subr.bf16.mxu0 0
    %223 = vmatpush1.bf16.msra.mxu0 0
    %224 = vmatprep.subr.bf16.mxu0 0
    %225 = vmatpush1.bf16.msra.mxu0 0
    %226 = vmatprep.subr.bf16.mxu0 0
    %227 = vmatpush1.bf16.msra.mxu0 0
    %228 = vmatprep.subr.bf16.mxu0 0
    %229 = vmatpush1.bf16.msra.mxu0 0
    %230 = vmatprep.subr.bf16.mxu0 0
    %231 = vmatpush1.bf16.msra.mxu0 0
    %232 = vmatprep.mubr.bf16.mxu0 0
    %233 = vmatmul.mubr.bf16.gmra.mrb[0].mxu0 %v199
    %v234 = vpop.f32.mrb[0].mxu0
    %v235 = vadd.f32 0.0, %v234
    %v236 = vpop.f32.mrb[0].mxu0
    %v237 = vpop.f32.mrb[0].mxu0
    %v238 = vpop.f32.mrb[0].mxu0
    %239 = vdwg.mxu0
    %240 = vmatprep.subr.bf16.mxu0 0
    %241 = vmatpush1.bf16.msra.mxu0 %v98
    %242 = vmatprep.subr.bf16.mxu0 0
    %243 = vmatpush1.bf16.msra.mxu0 %v99
    %244 = vmatprep.subr.bf16.mxu0 0
    %245 = vmatpush1.bf16.msra.mxu0 %v100
    %246 = vmatprep.subr.bf16.mxu0 0
    %247 = vmatpush1.bf16.msra.mxu0 %v101
    %248 = vmatprep.subr.bf16.mxu0 0
    %249 = vmatpush1.bf16.msra.mxu0 %v102
    %250 = vmatprep.subr.bf16.mxu0 0
    %251 = vmatpush1.bf16.msra.mxu0 %v103
    %252 = vmatprep.subr.bf16.mxu0 0
    %253 = vmatpush1.bf16.msra.mxu0 %v104
    %254 = vmatprep.subr.bf16.mxu0 0
    %255 = vmatpush1.bf16.msra.mxu0 %v105
    %256 = vmatprep.subr.bf16.mxu0 0
    %257 = vmatpush1.bf16.msra.mxu0 0
    %258 = vmatprep.subr.bf16.mxu0 0
    %259 = vmatpush1.bf16.msra.mxu0 0
    %260 = vmatprep.subr.bf16.mxu0 0
    %261 = vmatpush1.bf16.msra.mxu0 0
    %262 = vmatprep.subr.bf16.mxu0 0
    %263 = vmatpush1.bf16.msra.mxu0 0
    %264 = vmatprep.subr.bf16.mxu0 0
    %265 = vmatpush1.bf16.msra.mxu0 0
    %266 = vmatprep.subr.bf16.mxu0 0
    %267 = vmatpush1.bf16.msra.mxu0 0
    %268 = vmatprep.subr.bf16.mxu0 0
    %269 = vmatpush1.bf16.msra.mxu0 0
    %270 = vmatprep.subr.bf16.mxu0 0
    %271 = vmatpush1.bf16.msra.mxu0 0
    %272 = vmatprep.mubr.bf16.mxu0 0
    %273 = vmatmul.mubr.bf16.gmra.mrb[0].mxu0 %v196
    %v274 = vpop.f32.mrb[0].mxu0
    %v275 = vadd.f32 %v235, %v274
    %v276 = vpop.f32.mrb[0].mxu0
    %v277 = vpop.f32.mrb[0].mxu0
    %v278 = vpop.f32.mrb[0].mxu0
    %279 = vdwg.mxu0
    %v280 = vadd.f32 %v275, 1e-05
    %v281 = vrsqrt.pop %v280
    %v282 = vmul.f32 %v194, %v281
    %v283 = vld [vmem:[%s2] sm:$0x1]
    %v285 = vlaneseq
    %v286 = vshrl.u32 %v285, 7
    %v287 = vsub.s32 0, %v286
    %v288 = vrot.slane %v283, %v287
    %v290 = vmul.f32 %v282, %v288
    %v291 = vld [vmem:[%s3] sm:$0x1]
    %v293 = vlaneseq
    %v294 = vshrl.u32 %v293, 7
    %v295 = vsub.s32 0, %v294
    %v296 = vrot.slane %v291, %v295
    %v298 = vadd.f32 %v290, %v296
    %299 = vst [vmem:[#allocation7] sm:$0xf] %v298
    // Predicated region
    $region26: #{tpu_custom_call.1} parent=1 // pred_check
      _
    $region27: #{tpu_custom_call.1} parent=1 // pred_check_branch
      %301 = sbr.rel (0) target = $region29
    $region28: #{tpu_custom_call.1} parent=1 // pred_region
      %s303 = ssub.s32 64, 64
      %304 = vsyncadd [#allocation4], %s303
      %s306 = sshll.u32 [#allocation7], 4
      %s307 = int_to_ptr.vmem [resolvable:$true] %s306
      %309 = dma.vmem_to_hbm [thread:$0]  %s307, 64, %s4, [#allocation4]
    $region29: #{tpu_custom_call.1} parent=1 // pred_fallthru
      _
    // Predicated region
    $region30: #{tpu_custom_call.1} parent=1 // pred_check
      _
    $region31: #{tpu_custom_call.1} parent=1 // pred_check_branch
      %311 = sbr.rel (0) target = $region33
    $region32: #{tpu_custom_call.1} parent=1 // pred_region
      %312 = dma.done [#allocation4], 64
    $region33: #{tpu_custom_call.1} parent=1 // pred_fallthru
      _
    %313 = vsyncpa [#allocation3], 1
    %314 = vsyncpa [#allocation6], 1
    %315 = vsyncpa [#allocation4], 1

</llo_original>
